<compile_context>
chip_gen: v7x
topology: tpu7x:2x2x1
jax: 0.10.0
libtpu: 0.0.40
codegen_flags: <defaults>
</compile_context>

<pallas_src>
import jax
import jax.numpy as jnp
from jax.experimental import pallas as pl
from jax.experimental.pallas import tpu as pltpu

EPS = 1e-5
CP = 128            # lane-dense padded output-channel count
MAX_ROWS_P1 = 128   # conv+stats pass: 128x128 f32 acc = 16 vregs (no spill)
MAX_ROWS_P2 = 512   # BN/ReLU pass: elementwise & mem-bound -> bigger tiles


def _round_up(x, m):
    return ((x + m - 1) // m) * m


# ----------------------------------------------------------------------------- kernels
def _conv_stats_kernel(lhs_ref, w_ref, y_ref, stats_ref):
    """One bf16 GEMM per tile (f32 MXU accumulation) + per-image sum / sum-of-squares
    partials accumulated in a revisited (1, 2, CP) output block across the row-tile axis."""
    t = pl.program_id(1)

    acc = jnp.dot(lhs_ref[0], w_ref[...], preferred_element_type=jnp.float32)   # (tm, CP)
    y_ref[0] = acc.astype(y_ref.dtype)                                           # bf16 pre-BN tile

    @pl.when(t == 0)
    def _init():
        stats_ref[...] = jnp.zeros_like(stats_ref)

    # Padded LHS rows / lanes are all-zero -> contribute nothing; no mask needed.
    s = jnp.sum(acc, axis=0, keepdims=True)
    ss = jnp.sum(acc * acc, axis=0, keepdims=True)
    stats_ref[0] = stats_ref[0] + jnp.concatenate([s, ss], axis=0)               # single (2,CP) update


def _make_bn_relu_kernel(m_total):
    """Train-mode BN (biased var via E[y^2]-mean^2) + ReLU + alpha on (1, tm, CP) tiles.
    Stat finalization is recomputed per tile (trivial) so both grid axes stay parallel."""
    inv_m = 1.0 / float(m_total)

    def kernel(y_ref, stats_ref, gamma_ref, beta_ref, alpha_ref, o_ref):
        st = jnp.sum(stats_ref[...], axis=0)                    # (2, CP) combine per-image partials
        mean = st[0:1, :] * inv_m
        # TODO(synk): E[y^2]-mean^2 can cancel when |mean| >> std; fine at these scales (f32 stats).
        var = st[1:2, :] * inv_m - mean * mean
        inv = jax.lax.rsqrt(var + EPS)                          # EUP slot
        scale = gamma_ref[...] * inv                            # (1, CP)
        shift = beta_ref[...] - mean * scale                    # (1, CP)

        y = y_ref[...].astype(jnp.float32)                      # (1, tm, CP)
        out = jnp.maximum(y * scale.reshape(1, 1, CP) + shift.reshape(1, 1, CP), 0.0)
        o_ref[...] = (out * alpha_ref[0]).astype(o_ref.dtype)

    return kernel


# ----------------------------------------------------------------------------- wrappers
def _extract_patches(x_nhwc, k):
    """[N,H,W,C] -> [N, OH*OW, k*k*C] channels-last im2col; patch lane order (kh, kw, c)."""
    n, h, w, c = x_nhwc.shape
    oh, ow = h - k + 1, w - k + 1
    cols = [x_nhwc[:, kh:kh + oh, kw:kw + ow, :] for kh in range(k) for kw in range(k)]
    return jnp.concatenate(cols, axis=-1).reshape(n, oh * ow, k * k * c), oh, ow


def _pack_weight(w_oihw, kp, cp):
    """[Cout, Cin, k, k] -> [KP, CP] bf16; row order (kh, kw, ci) matches the patch lanes."""
    cout, cin, k, _ = w_oihw.shape
    w = jnp.transpose(w_oihw, (2, 3, 1, 0)).reshape(k * k * cin, cout)
    return jnp.pad(w, ((0, kp - k * k * cin), (0, cp - cout))).astype(jnp.bfloat16)


def _pad_vec(v, cp):
    return jnp.pad(v.reshape(1, -1).astype(jnp.float32), ((0, 0), (0, cp - v.shape[0])))


def _conv_bn_relu_stage(x_nhwc, w_oihw, gamma, beta, alpha, out_dtype):
    """alpha * relu(BN_train(conv_valid(x, w))) as two pallas_calls.
    Conv bias omitted on purpose: cancelled exactly by the train-mode BN mean subtraction."""
    n = x_nhwc.shape[0]
    cout, cin, k, _ = w_oihw.shape
    assert cout <= CP, "output channels must fit one lane-dense 128-wide tile"

    patches, oh, ow = _extract_patches(x_nhwc, k)               # [N, rows, k*k*cin]
    rows = oh * ow
    kp = _round_up(k * k * cin, CP)                             # contraction depth (lanes)

    tm1 = min(MAX_ROWS_P1, _round_up(rows, 8))
    n_t1 = pl.cdiv(rows, tm1)
    rows_pad = n_t1 * tm1
    tm2 = tm1                                                   # pass-2 tile: multiple of tm1, <= 512
    while tm2 * 2 <= MAX_ROWS_P2 and rows_pad % (tm2 * 2) == 0:
        tm2 *= 2
    n_t2 = rows_pad // tm2

    # bf16 im2col LHS (zero padding in rows and lanes): same HBM footprint as a
    # 128-channel-padded activation, half the bytes of an f32 layout.
    lhs = jnp.pad(patches, ((0, 0), (0, rows_pad - rows), (0, kp - k * k * cin))
                  ).astype(jnp.bfloat16)
    w_p = _pack_weight(w_oihw, kp, CP)
    g_p, b_p = _pad_vec(gamma, CP), _pad_vec(beta, CP)
    m_total = n * rows                                          # real elements per channel for BN

    # pass 1: conv tiles (bf16) + per-image sum / sumsq partials (f32)
    y, stats = pl.pallas_call(
        _conv_stats_kernel,
        grid=(n, n_t1),
        in_specs=[
            pl.BlockSpec((1, tm1, kp), lambda i, t: (i, t, 0)),   # im2col row tile
            pl.BlockSpec((kp, CP), lambda i, t: (0, 0)),          # packed bf16 weights (resident)
        ],
        out_specs=[
            pl.BlockSpec((1, tm1, CP), lambda i, t: (i, t, 0)),   # pre-BN activation (bf16)
            pl.BlockSpec((1, 2, CP), lambda i, t: (i, 0, 0)),     # per-image partial stats (revisited)
        ],
        out_shape=[
            jax.ShapeDtypeStruct((n, rows_pad, CP), jnp.bfloat16),
            jax.ShapeDtypeStruct((n, 2, CP), jnp.float32),
        ],
        compiler_params=pltpu.CompilerParams(
            dimension_semantics=("parallel", "arbitrary")),
    )(lhs, w_p)

    # pass 2: BN normalize + ReLU + alpha (elementwise, bigger row tiles)
    out = pl.pallas_call(
        _make_bn_relu_kernel(m_total),
        grid=(n, n_t2),
        in_specs=[
            pl.BlockSpec((1, tm2, CP), lambda i, t: (i, t, 0)),
            pl.BlockSpec((n, 2, CP), lambda i, t: (0, 0, 0)),
            pl.BlockSpec((1, CP), lambda i, t: (0, 0)),
            pl.BlockSpec((1, CP), lambda i, t: (0, 0)),
            pl.BlockSpec(memory_space=pltpu.MemorySpace.SMEM),    # alpha scalar
        ],
        out_specs=pl.BlockSpec((1, tm2, CP), lambda i, t: (i, t, 0)),
        out_shape=jax.ShapeDtypeStruct((n, rows_pad, CP), out_dtype),
        compiler_params=pltpu.CompilerParams(
            dimension_semantics=("parallel", "parallel")),
    )(y, stats, g_p, b_p, alpha)

    # drop padded rows / lanes (small XLA slice on the already-reduced tensor)
    return out[:, :rows, :cout].reshape(n, oh, ow, cout)


def special_adapter_v1_forward(x_nchw, params, use_alpha=True):
    """x_nchw: [N, in_planes, H, W] f32 (same convention as the PyTorch module)."""
    k = params["kernel_size"]

    x = jnp.transpose(x_nchw, (0, 2, 3, 1)).astype(jnp.float32)  # NCHW -> NHWC once
    one = jnp.ones((1,), jnp.float32)

    # ---- stage 1: conv(cin -> cmid, k, valid) + BN1(train) + ReLU (bf16 intermediate) ----
    mid = _conv_bn_relu_stage(x, params["conv_w"], params["bn1_gamma"],
                              params["bn1_beta"], one, jnp.bfloat16)

    # ---- stage 2: convTranspose(cmid -> cin, k) + BN2(train) + ReLU + alpha --------------
    # ConvTranspose2d(stride=1, pad=0) == valid conv on a (k-1)-zero-padded input with a
    # spatially flipped kernel and swapped in/out channels.
    pad = k - 1
    mid_p = jnp.pad(mid, ((0, 0), (pad, pad), (pad, pad), (0, 0)))
    w_eq = jnp.flip(params["convT_w"], axis=(2, 3)).transpose(1, 0, 2, 3)   # [cin, cmid, k, k]
    alpha = (jnp.asarray(params["alpha"], jnp.float32).reshape((1,)) if use_alpha else one)
    out = _conv_bn_relu_stage(mid_p, w_eq, params["bn2_gamma"],
                              params["bn2_beta"], alpha, jnp.float32)       # [N, H, W, cin]

    return jnp.transpose(out, (0, 3, 1, 2))


# ----------------------------------------------------------------------------- reference (pure JAX, f32)
def _reference_forward(x, params, use_alpha=True):
    k = params["kernel_size"]

    def bn_relu(y, gamma, beta):                       # y: NCHW, train-mode BN
        mean = y.mean(axis=(0, 2, 3), keepdims=True)
        var = ((y - mean) ** 2).mean(axis=(0, 2, 3), keepdims=True)
        y = (y - mean) * jax.lax.rsqrt(var + EPS)
        y = y * gamma.reshape(1, -1, 1, 1) + beta.reshape(1, -1, 1, 1)
        return jnp.maximum(y, 0.0)

    def conv(x, w, b):
        y = jax.lax.conv_general_dilated(
            x, w, window_strides=(1, 1), padding="VALID",
            dimension_numbers=("NCHW", "OIHW", "NCHW"),
            precision=jax.lax.Precision.HIGHEST)
        return y + b.reshape(1, -1, 1, 1)

    out = bn_relu(conv(x, params["conv_w"], params["conv_b"]),
                  params["bn1_gamma"], params["bn1_beta"])
    pad = k - 1
    out_p = jnp.pad(out, ((0, 0), (0, 0), (pad, pad), (pad, pad)))
    w_eq = jnp.flip(params["convT_w"], axis=(2, 3)).transpose(1, 0, 2, 3)
    out = bn_relu(conv(out_p, w_eq, params["convT_b"]),
                  params["bn2_gamma"], params["bn2_beta"])
    if use_alpha:
        out = out * params["alpha"]
    return out


# ----------------------------------------------------------------------------- main
if __name__ == "__main__":
    N, in_planes, mid_planes, H, W, K = 2, 4, 8, 16, 16, 3

    key = jax.random.PRNGKey(0)
    k_x, k_w1, k_b1, k_w2, k_b2 = jax.random.split(key, 5)

    x = jax.random.normal(k_x, (N, in_planes, H, W), dtype=jnp.float32)

    params = {
        "in_planes": in_planes,
        "mid_planes": mid_planes,
        "kernel_size": K,
        # Conv2d(in_planes, mid_planes, 3)
        "conv_w": jax.random.normal(k_w1, (mid_planes, in_planes, K, K), jnp.float32) * 0.1,
        "conv_b": jax.random.normal(k_b1, (mid_planes,), jnp.float32) * 0.1,
        # BatchNorm2d(mid_planes) affine params (fresh init)
        "bn1_gamma": jnp.ones((mid_planes,), jnp.float32),
        "bn1_beta": jnp.zeros((mid_planes,), jnp.float32),
        # ConvTranspose2d(mid_planes, in_planes, 3): weight is [Cin_t=mid, Cout_t=in, k, k]
        "convT_w": jax.random.normal(k_w2, (mid_planes, in_planes, K, K), jnp.float32) * 0.1,
        "convT_b": jax.random.normal(k_b2, (in_planes,), jnp.float32) * 0.1,
        "bn2_gamma": jnp.ones((in_planes,), jnp.float32),
        "bn2_beta": jnp.zeros((in_planes,), jnp.float32),
        # alpha = 0.02 as in the module
        "alpha": jnp.float32(0.02),
    }

    out = jax.block_until_ready(special_adapter_v1_forward(x, params, use_alpha=True))
    ref = jax.block_until_ready(_reference_forward(x, params, use_alpha=True))

    assert out.shape == (N, in_planes, H, W), out.shape
    max_diff = float(jnp.max(jnp.abs(out - ref)))
    # bf16-fed MXU + bf16 intermediates (f32 accumulation / stats) vs f32 reference
    assert jnp.allclose(out, ref, rtol=2e-2, atol=2e-3), f"max abs diff {max_diff}"

    print("KERNEL_OK")
</pallas_src>

<mosaic_0001>
module attributes {stable_mosaic.version = 11 : i64} {
  func.func @_conv_stats_kernel(%arg0: i32, %arg1: i32, %arg2: memref<1x128x128xbf16, #tpu.memory_space<vmem>>, %arg3: memref<128x128xbf16, #tpu.memory_space<vmem>>, %arg4: memref<1x128x128xbf16, #tpu.memory_space<vmem>>, %arg5: memref<1x2x128xf32, #tpu.memory_space<vmem>>) attributes {dimension_semantics = [#tpu.dimension_semantics<parallel>, #tpu.dimension_semantics<arbitrary>], iteration_bounds = array<i64: 2, 2>, scalar_prefetch = 0 : i64, scratch_operands = 0 : i64, tpu.core_type = #tpu.core_type<tc>, window_params = [{transform_indices = @transform_0, window_bounds = array<i64: 1, 128, 128>}, {pipeline_mode = #tpu.pipeline_mode<synchronous>, transform_indices = @transform_1, window_bounds = array<i64: 128, 128>}, {transform_indices = @transform_2, window_bounds = array<i64: 1, 128, 128>}, {transform_indices = @transform_3, window_bounds = array<i64: 1, 2, 128>}]} {
    %c0 = arith.constant 0 : index
    %c0_0 = arith.constant 0 : index
    %c0_1 = arith.constant 0 : index
    %0 = vector.load %arg2[%c0, %c0_0, %c0_1] : memref<1x128x128xbf16, #tpu.memory_space<vmem>>, vector<1x128x128xbf16>
    %1 = vector.shape_cast %0 : vector<1x128x128xbf16> to vector<128x128xbf16>
    %c0_2 = arith.constant 0 : index
    %c0_3 = arith.constant 0 : index
    %2 = vector.load %arg3[%c0_2, %c0_3] : memref<128x128xbf16, #tpu.memory_space<vmem>>, vector<128x128xbf16>
    %cst = arith.constant dense<0.000000e+00> : vector<128x128xf32>
    %3 = tpu.matmul %1, %2, %cst {dimension_numbers = #tpu.dot_dimension_numbers<[1], [0], [0], [1], [0, 0, 1, 1], [], []>} : vector<128x128xbf16>, vector<128x128xbf16>, vector<128x128xf32> -> vector<128x128xf32>
    %4 = arith.truncf %3 : vector<128x128xf32> to vector<128x128xbf16>
    %c0_4 = arith.constant 0 : index
    %c0_5 = arith.constant 0 : index
    %c0_6 = arith.constant 0 : index
    %5 = vector.load %arg4[%c0_4, %c0_5, %c0_6] : memref<1x128x128xbf16, #tpu.memory_space<vmem>>, vector<1x128x128xbf16>
    %6 = vector.shape_cast %5 : vector<1x128x128xbf16> to vector<128x128xbf16>
    %7 = vector.shape_cast %4 : vector<128x128xbf16> to vector<1x128x128xbf16>
    tpu.vector_store %arg4[%c0_4, %c0_5, %c0_6], %7 {strides = array<i32>} : memref<1x128x128xbf16, #tpu.memory_space<vmem>>, vector<1x128x128xbf16>,
    %c0_i32 = arith.constant 0 : i32
    %8 = arith.cmpi eq, %arg1, %c0_i32 : i32
    %9 = arith.extui %8 : i1 to i32
    %c0_i32_7 = arith.constant 0 : i32
    %10 = arith.cmpi ne, %9, %c0_i32_7 : i32
    scf.if %10 {
      %cst_16 = arith.constant 0.000000e+00 : f32
      %23 = vector.broadcast %cst_16 : f32 to vector<1x2x128xf32>
      %c0_17 = arith.constant 0 : index
      %c0_18 = arith.constant 0 : index
      %c0_19 = arith.constant 0 : index
      %24 = vector.load %arg5[%c0_17, %c0_18, %c0_19] : memref<1x2x128xf32, #tpu.memory_space<vmem>>, vector<1x2x128xf32>
      tpu.vector_store %arg5[%c0_17, %c0_18, %c0_19], %23 {strides = array<i32>} : memref<1x2x128xf32, #tpu.memory_space<vmem>>, vector<1x2x128xf32>,
    } else {
    }
    %cst_8 = arith.constant dense<0.000000e+00> : vector<128xf32>
    %11 = vector.multi_reduction <add>, %3, %cst_8 [0] : vector<128x128xf32> to vector<128xf32>
    %12 = vector.shape_cast %11 : vector<128xf32> to vector<1x128xf32>
    %13 = arith.mulf %3, %3 : vector<128x128xf32>
    %cst_9 = arith.constant dense<0.000000e+00> : vector<128xf32>
    %14 = vector.multi_reduction <add>, %13, %cst_9 [0] : vector<128x128xf32> to vector<128xf32>
    %15 = vector.shape_cast %14 : vector<128xf32> to vector<1x128xf32>
    %c0_10 = arith.constant 0 : index
    %c0_11 = arith.constant 0 : index
    %c0_12 = arith.constant 0 : index
    %16 = vector.load %arg5[%c0_10, %c0_11, %c0_12] : memref<1x2x128xf32, #tpu.memory_space<vmem>>, vector<1x2x128xf32>
    %17 = vector.shape_cast %16 : vector<1x2x128xf32> to vector<2x128xf32>
    %18 = tpu.concatenate %12, %15 in 0 : vector<1x128xf32>, vector<1x128xf32> -> vector<2x128xf32>
    %19 = arith.addf %17, %18 : vector<2x128xf32>
    %c0_13 = arith.constant 0 : index
    %c0_14 = arith.constant 0 : index
    %c0_15 = arith.constant 0 : index
    %20 = vector.load %arg5[%c0_13, %c0_14, %c0_15] : memref<1x2x128xf32, #tpu.memory_space<vmem>>, vector<1x2x128xf32>
    %21 = vector.shape_cast %20 : vector<1x2x128xf32> to vector<2x128xf32>
    %22 = vector.shape_cast %19 : vector<2x128xf32> to vector<1x2x128xf32>
    tpu.vector_store %arg5[%c0_13, %c0_14, %c0_15], %22 {strides = array<i32>} : memref<1x2x128xf32, #tpu.memory_space<vmem>>, vector<1x2x128xf32>,
    return
  }
  func.func @transform_0(%arg0: i32, %arg1: i32) -> (i32, i32, i32) {
    %c0_i32 = arith.constant 0 : i32
    %c0_i32_0 = arith.constant 0 : i32
    return %arg0, %arg1, %c0_i32 : i32, i32, i32
  }
  func.func @transform_1(%arg0: i32, %arg1: i32) -> (i32, i32) {
    %c0_i32 = arith.constant 0 : i32
    %c0_i32_0 = arith.constant 0 : i32
    %c0_i32_1 = arith.constant 0 : i32
    return %c0_i32, %c0_i32_0 : i32, i32
  }
  func.func @transform_2(%arg0: i32, %arg1: i32) -> (i32, i32, i32) {
    %c0_i32 = arith.constant 0 : i32
    %c0_i32_0 = arith.constant 0 : i32
    return %arg0, %arg1, %c0_i32 : i32, i32, i32
  }
  func.func @transform_3(%arg0: i32, %arg1: i32) -> (i32, i32, i32) {
    %c0_i32 = arith.constant 0 : i32
    %c0_i32_0 = arith.constant 0 : i32
    %c0_i32_1 = arith.constant 0 : i32
    return %arg0, %c0_i32, %c0_i32_0 : i32, i32, i32
  }
}

</mosaic_0001>

<llo_original>
// kernel: tpu_custom_call.1
$region0: #{tpu_custom_call.1}
  #allocation0 [shape = 'u32[]', space=smem, size = 0x4, offset = 0x4, fixed_abs, tag = 'smem constant byte address 0x4 - core index']
  #allocation1 [shape = 'u32[144,128]{1,0:T(1,128)}', space=vmem, size = 0x12000, scoped, tag = 'internal scratch']
  %s0 = inlined_call_operand.hbm [shape: bf16[2,256,128], index: 0, kind: input, shape index: {}]
  %s1 = inlined_call_operand.hbm [shape: bf16[128,128], index: 1, kind: input, shape index: {}]
  %s2 = inlined_call_operand.hbm [shape: bf16[2,256,128], index: 2, kind: output, shape index: {0}]
  %s3 = inlined_call_operand.hbm [shape: f32[2,2,128], index: 3, kind: output, shape index: {1}]
  %4 = xla_tuple %s2, %s3
  %s5 = sld [smem:[#allocation0]]
  $region61: #{tpu_custom_call.1} parent=0
    _
  %s7 = ssub.s32 1, %s5
  %s8 = scalar_select 0, %s7, %s5
  $region1: #{tpu_custom_call.1} parent=0
    #allocation2 [shape = 'u8[65536]{0}', space=vmem, size = 0x10000, scoped, tag = 'input window, operand 0']
    #allocation3 [shape = 's32[2]{0}', space=sflag, size = 0x8, scoped, tag = 'scoped memory for tpu_custom_call.1']
    #allocation4 [shape = 's32[2]{0}', space=sflag, size = 0x8, scoped, tag = 'scoped memory for tpu_custom_call.1']
    #allocation5 [shape = 'u8[32768]{0}', space=vmem, size = 0x8000, scoped, tag = 'input window, operand 1, single buffered']
    #allocation6 [shape = 's32[1]{0}', space=sflag, size = 0x4, scoped, tag = 'scoped memory for tpu_custom_call.1']
    #allocation7 [shape = 'u8[65536]{0}', space=vmem, size = 0x10000, scoped, tag = 'output window, operand 0']
    #allocation8 [shape = 'u8[2048]{0}', space=vmem, size = 0x800, scoped, tag = 'output window, operand 1']
    #allocation9 [shape = 's32[2]{0}', space=sflag, size = 0x8, scoped, tag = 'scoped memory for tpu_custom_call.1']
    %9 = vsyncpa [#allocation3], 0
    %s10 = scalar_lea.sflag [#allocation3], 1
    %11 = vsyncpa %s10, 0
    %12 = vsyncpa [#allocation6], 0
    %13 = vsyncpa [#allocation4], 0
    %s14 = scalar_lea.sflag [#allocation4], 1
    %15 = vsyncpa %s14, 0
    %16 = vsyncpa [#allocation9], 0
    %s17 = scalar_lea.sflag [#allocation9], 1
    %18 = vsyncpa %s17, 0
    loop: start=0, step=1, limit=6
    $region2: #{tpu_custom_call.1} parent=1 // loop_pre_header
      _
    $region3: #{tpu_custom_call.1} parent=1 // loop_header
      %s20 = sphi 0, %s24
      %p21 = scmp.ge.s32.totalorder %s20, 6
      %s27 = sphi 0, %s39
      %s28 = sphi 0, %s35
      %s29 = sphi 0, %s27
      %s30 = sphi 0, %s28
      %s31 = sphi 0, %s29
      %s32 = sphi 0, %s30
      %s44 = sphi 0, %s46
      %s47 = sphi 0, %s44
      %s48 = sphi 0, %s47
      %s64 = sphi 0, %s48
      %s68 = sphi 0, %s68
      %s70 = sphi 0, %s68
      %s71 = sphi 0, %s70
      %s85 = sphi 0, %s71
      %s93 = sphi 0, %s95
      %s96 = sphi 0, %s93
      %s97 = sphi 0, %s96
      %s113 = sphi 0, %s97
      %s119 = sphi 0, %s121
      %s122 = sphi 0, %s119
      %s123 = sphi 0, %s122
      %s139 = sphi 0, %s123
    $region4: #{tpu_custom_call.1} parent=1 // loop_header_branch
      %23 = sbr.rel (%p21) target = $region8
    $region5: #{tpu_custom_call.1} parent=1 // loop_body
      %s25 = ssub.s32 %s20, 1
      %s26 = ssub.s32 %s20, 2
      %s33 = sadd.s32 1, %s28
      %p34 = scmp.ge.s32.totalorder %s33, 2
      %s35 = scalar_select %p34, 0, %s33
      %s36 = sadd.s32 1, %s27
      %s37 = scalar_select %p34, %s36, %s27
      %p38 = scmp.ge.s32.totalorder %s37, 2
      %s39 = scalar_select %p38, 0, %s37
      %s40 = ssub.s32 %s27, %s39
      %s41 = ssub.s32 %s28, %s35
      %s42 = sor.u32 %s40, %s41
      %p43 = scmp.eq.s32.totalorder %s42, 0
      %s45 = sadd.s32 %s44, 1
      %s46 = scalar_select %p43, %s44, %s45
      %p49 = pneg %p43
      %p50 = scmp.eq.s32.totalorder %s20, 3
      %p51 = por %p49, %p50
      %p52 = scmp.ne.s32.totalorder %s44, %s47
      %p53 = scmp.eq.s32.totalorder %s20, 0
      %p54 = por %p52, %p53
      %p55 = scmp.ne.s32.totalorder %s44, %s47
      %p56 = scmp.eq.s32.totalorder %s25, 3
      %p57 = por %p55, %p56
      %p58 = scmp.ne.s32.totalorder %s47, %s48
      %p59 = scmp.eq.s32.totalorder %s25, 0
      %p60 = por %p58, %p59
      %p61 = scmp.ne.s32.totalorder %s47, %s48
      %p62 = scmp.eq.s32.totalorder %s26, 3
      %p63 = por %p61, %p62
      %p65 = scmp.ne.s32.totalorder %s48, %s64
      %p66 = scmp.eq.s32.totalorder %s26, 0
      %p67 = por %p65, %p66
      %s69 = sadd.s32 %s68, 1
      %p72 = scmp.eq.s32.totalorder %s20, 3
      %p73 = scmp.ne.s32.totalorder %s68, %s70
      %p74 = scmp.eq.s32.totalorder %s20, 0
      %p75 = por %p73, %p74
      %p76 = scmp.ne.s32.totalorder %s68, %s70
      %p77 = scmp.eq.s32.totalorder %s25, 3
      %p78 = por %p76, %p77
      %p79 = scmp.ne.s32.totalorder %s70, %s71
      %p80 = scmp.eq.s32.totalorder %s25, 0
      %p81 = por %p79, %p80
      %p82 = scmp.ne.s32.totalorder %s70, %s71
      %p83 = scmp.eq.s32.totalorder %s26, 3
      %p84 = por %p82, %p83
      %p86 = scmp.ne.s32.totalorder %s71, %s85
      %p87 = scmp.eq.s32.totalorder %s26, 0
      %p88 = por %p86, %p87
      %s89 = ssub.s32 %s27, %s39
      %s90 = ssub.s32 %s28, %s35
      %s91 = sor.u32 %s89, %s90
      %p92 = scmp.eq.s32.totalorder %s91, 0
      %s94 = sadd.s32 %s93, 1
      %s95 = scalar_select %p92, %s93, %s94
      %p98 = pneg %p92
      %p99 = scmp.eq.s32.totalorder %s20, 3
      %p100 = por %p98, %p99
      %p101 = scmp.ne.s32.totalorder %s93, %s96
      %p102 = scmp.eq.s32.totalorder %s20, 0
      %p103 = por %p101, %p102
      %p104 = scmp.ne.s32.totalorder %s93, %s96
      %p105 = scmp.eq.s32.totalorder %s25, 3
      %p106 = por %p104, %p105
      %p107 = scmp.ne.s32.totalorder %s96, %s97
      %p108 = scmp.eq.s32.totalorder %s25, 0
      %p109 = por %p107, %p108
      %p110 = scmp.ne.s32.totalorder %s96, %s97
      %p111 = scmp.eq.s32.totalorder %s26, 3
      %p112 = por %p110, %p111
      %p114 = scmp.ne.s32.totalorder %s97, %s113
      %p115 = scmp.eq.s32.totalorder %s26, 0
      %p116 = por %p114, %p115
      %s117 = ssub.s32 %s27, %s39
      %p118 = scmp.eq.s32.totalorder %s117, 0
      %s120 = sadd.s32 %s119, 1
      %s121 = scalar_select %p118, %s119, %s120
      %p124 = pneg %p118
      %p125 = scmp.eq.s32.totalorder %s20, 3
      %p126 = por %p124, %p125
      %p127 = scmp.ne.s32.totalorder %s119, %s122
      %p128 = scmp.eq.s32.totalorder %s20, 0
      %p129 = por %p127, %p128
      %p130 = scmp.ne.s32.totalorder %s119, %s122
      %p131 = scmp.eq.s32.totalorder %s25, 3
      %p132 = por %p130, %p131
      %p133 = scmp.ne.s32.totalorder %s122, %s123
      %p134 = scmp.eq.s32.totalorder %s25, 0
      %p135 = por %p133, %p134
      %p136 = scmp.ne.s32.totalorder %s122, %s123
      %p137 = scmp.eq.s32.totalorder %s26, 3
      %p138 = por %p136, %p137
      %p140 = scmp.ne.s32.totalorder %s123, %s139
      %p141 = scmp.eq.s32.totalorder %s26, 0
      %p142 = por %p140, %p141
      %p143 = scmp.le.s32.totalorder 1, %s20
      %p144 = scmp.lt.s32.totalorder %s20, 5
      %p145 = pnand %p143, %p144
      %p146 = pneg %p145
      // Predicated region
      $region9: #{tpu_custom_call.1} parent=5 // pred_check
        _
      $region10: #{tpu_custom_call.1} parent=5 // pred_check_branch
        %148 = sbr.rel (%p145) target = $region12
      $region11: #{tpu_custom_call.1} parent=5 // pred_region
        %s149 = ssub.s32 %s20, 1
        // Predicated region
        $region13: #{tpu_custom_call.1} parent=11 // pred_check
          %p150 = pneg %p81
        $region14: #{tpu_custom_call.1} parent=11 // pred_check_branch
          %152 = sbr.rel (%p150) target = $region16
        $region15: #{tpu_custom_call.1} parent=11 // pred_region
          %s154 = ssub.s32 1024, 1024
          %155 = vsyncadd [#allocation6], %s154
          %s156 = sshll.u32 [#allocation5], 4
          %s157 = int_to_ptr.vmem [resolvable:$true] %s156
          %162 = dma.hbm_to_vmem [thread:$0]  %s1, 1024, %s157, [#allocation6], 64, 64, 4
        $region16: #{tpu_custom_call.1} parent=11 // pred_fallthru
          _
      $region12: #{tpu_custom_call.1} parent=5 // pred_fallthru
        _
      %p163 = scmp.lt.s32.totalorder %s20, 4
      // Predicated region
      $region17: #{tpu_custom_call.1} parent=5 // pred_check
        %p164 = pneg %p163
      $region18: #{tpu_custom_call.1} parent=5 // pred_check_branch
        %166 = sbr.rel (%p164) target = $region20
      $region19: #{tpu_custom_call.1} parent=5 // pred_region
        // Predicated region
        $region21: #{tpu_custom_call.1} parent=19 // pred_check
          %p167 = pneg %p54
        $region22: #{tpu_custom_call.1} parent=19 // pred_check_branch
          %169 = sbr.rel (%p167) target = $region24
        $region23: #{tpu_custom_call.1} parent=19 // pred_region
          %s170 = sand.u32 %s44, 1
          %s171 = scalar_lea.sflag [#allocation3], %s170
          %s172 = sand.u32 %s44, 1
          %s173 = smul.addr %s172, 64
          %s174 = scalar_lea.vmem [#allocation2], %s173
          %s175 = smul.u32 16, %s28
          %s177 = ssub.s32 1024, 1024
          %178 = vsyncadd %s171, %s177
          %s179 = smul.addr %s27, 32
          %s180 = sadd.s32 %s175, %s179
          %s181 = smul.addr %s180, 64
          %s182 = scalar_lea.hbm %s0, %s181
          %s183 = sshll.u32 %s174, 4
          %s184 = int_to_ptr.vmem [resolvable:$true] %s183
          %189 = dma.hbm_to_vmem [thread:$0]  %s182, 1024, %s184, %s171, 64, 64, 4
        $region24: #{tpu_custom_call.1} parent=19 // pred_fallthru
          _
      $region20: #{tpu_custom_call.1} parent=5 // pred_fallthru
        _
      %p190 = scmp.le.s32.totalorder 1, %s20
      %p191 = scmp.lt.s32.totalorder %s20, 5
      %p192 = pnand %p190, %p191
      %p193 = pneg %p192
      // Predicated region
      $region25: #{tpu_custom_call.1} parent=5 // pred_check
        _
      $region26: #{tpu_custom_call.1} parent=5 // pred_check_branch
        %195 = sbr.rel (%p192) target = $region28
      $region27: #{tpu_custom_call.1} parent=5 // pred_region
        %s196 = ssub.s32 %s20, 1
        %s197 = sand.u32 %s47, 1
        %s198 = scalar_lea.sflag [#allocation3], %s197
        %s199 = sand.u32 %s47, 1
        %s200 = smul.addr %s199, 64
        %s201 = scalar_lea.vmem [#allocation2], %s200
        // Predicated region
        $region29: #{tpu_custom_call.1} parent=27 // pred_check
          %p202 = pneg %p60
        $region30: #{tpu_custom_call.1} parent=27 // pred_check_branch
          %204 = sbr.rel (%p202) target = $region32
        $region31: #{tpu_custom_call.1} parent=27 // pred_region
          %205 = dma.done %s198, 1024
        $region32: #{tpu_custom_call.1} parent=27 // pred_fallthru
          _
        // Predicated region
        $region33: #{tpu_custom_call.1} parent=27 // pred_check
          %p206 = pneg %p81
        $region34: #{tpu_custom_call.1} parent=27 // pred_check_branch
          %208 = sbr.rel (%p206) target = $region36
        $region35: #{tpu_custom_call.1} parent=27 // pred_region
          %209 = dma.done [#allocation6], 1024
        $region36: #{tpu_custom_call.1} parent=27 // pred_fallthru
          _
        %s210 = sand.u32 %s47, 1
        %s211 = scalar_lea.sflag [#allocation3], %s210
        %s212 = sand.u32 %s47, 1
        %s213 = smul.addr %s212, 64
        %s214 = scalar_lea.vmem [#allocation2], %s213
        %p215 = pneg %p60
        %p216 = pneg %p57
        %p217 = pneg %p81
        %p218 = pneg %p78
        %p219 = pneg %p109
        %p220 = pneg %p106
        %s221 = sand.u32 %s96, 1
        %s222 = scalar_lea.sflag [#allocation4], %s221
        %s223 = sand.u32 %s96, 1
        %s224 = smul.addr %s223, 64
        %s225 = scalar_lea.vmem [#allocation7], %s224
        %p226 = pneg %p135
        %p227 = pneg %p132
        %s228 = sand.u32 %s122, 1
        %s229 = scalar_lea.sflag [#allocation9], %s228
        %s230 = sand.u32 %s122, 1
        %s231 = smul.addr %s230, 2
        %s232 = scalar_lea.vmem [#allocation8], %s231
        %s233 = smul.u32 16, %s30
        %s234 = smul.u32 16, %s30
        %v236 = vld [vmem:[%s201] sm:$0xf]
        %v237 = vld [vmem:[%s201 + $0x4] sm:$0xf]
        %v238 = vld [vmem:[%s201 + $0x8] sm:$0xf]
        %v239 = vld [vmem:[%s201 + $0xc] sm:$0xf]
        %v240 = vld [vmem:[%s201 + $0x10] sm:$0xf]
        %v241 = vld [vmem:[%s201 + $0x14] sm:$0xf]
        %v242 = vld [vmem:[%s201 + $0x18] sm:$0xf]
        %v243 = vld [vmem:[%s201 + $0x1c] sm:$0xf]
        %v244 = vld [vmem:[%s201 + $0x20] sm:$0xf]
        %v245 = vld [vmem:[%s201 + $0x24] sm:$0xf]
        %v246 = vld [vmem:[%s201 + $0x28] sm:$0xf]
        %v247 = vld [vmem:[%s201 + $0x2c] sm:$0xf]
        %v248 = vld [vmem:[%s201 + $0x30] sm:$0xf]
        %v249 = vld [vmem:[%s201 + $0x34] sm:$0xf]
        %v250 = vld [vmem:[%s201 + $0x38] sm:$0xf]
        %v251 = vld [vmem:[%s201 + $0x3c] sm:$0xf]
        %v252 = vld [vmem:[#allocation5] sm:$0xf]
        %v253 = vld [vmem:[#allocation5 + $0x4] sm:$0xf]
        %v254 = vld [vmem:[#allocation5 + $0x8] sm:$0xf]
        %v255 = vld [vmem:[#allocation5 + $0xc] sm:$0xf]
        %v256 = vld [vmem:[#allocation5 + $0x10] sm:$0xf]
        %v257 = vld [vmem:[#allocation5 + $0x14] sm:$0xf]
        %v258 = vld [vmem:[#allocation5 + $0x18] sm:$0xf]
        %v259 = vld [vmem:[#allocation5 + $0x1c] sm:$0xf]
        %v260 = vld [vmem:[#allocation5 + $0x20] sm:$0xf]
        %v261 = vld [vmem:[#allocation5 + $0x24] sm:$0xf]
        %v262 = vld [vmem:[#allocation5 + $0x28] sm:$0xf]
        %v263 = vld [vmem:[#allocation5 + $0x2c] sm:$0xf]
        %v264 = vld [vmem:[#allocation5 + $0x30] sm:$0xf]
        %v265 = vld [vmem:[#allocation5 + $0x34] sm:$0xf]
        %v266 = vld [vmem:[#allocation5 + $0x38] sm:$0xf]
        %v267 = vld [vmem:[#allocation5 + $0x3c] sm:$0xf]
        %v284 = vunpack.c.l.b16 %v236
        %v285 = vunpack.c.l.b16 %v237
        %v286 = vunpack.c.l.b16 %v238
        %v287 = vunpack.c.l.b16 %v239
        %v288 = vunpack.c.l.b16 %v240
        %v289 = vunpack.c.l.b16 %v241
        %v290 = vunpack.c.l.b16 %v242
        %v291 = vunpack.c.l.b16 %v243
        %v292 = vunpack.c.l.b16 %v244
        %v293 = vunpack.c.l.b16 %v245
        %v294 = vunpack.c.l.b16 %v246
        %v295 = vunpack.c.l.b16 %v247
        %v296 = vunpack.c.l.b16 %v248
        %v297 = vunpack.c.l.b16 %v249
        %v298 = vunpack.c.l.b16 %v250
        %v299 = vunpack.c.l.b16 %v251
        %v300 = vpack.c.b16 %v285, %v284
        %v301 = vpack.c.b16 %v287, %v286
        %v302 = vpack.c.b16 %v289, %v288
        %v303 = vpack.c.b16 %v291, %v290
        %v304 = vpack.c.b16 %v293, %v292
        %v305 = vpack.c.b16 %v295, %v294
        %v306 = vpack.c.b16 %v297, %v296
        %v307 = vpack.c.b16 %v299, %v298
        %v332 = vunpack.c.l.b16 %v252
        %v333 = vunpack.c.l.b16 %v253
        %v334 = vunpack.c.l.b16 %v254
        %v335 = vunpack.c.l.b16 %v255
        %v336 = vunpack.c.l.b16 %v256
        %v337 = vunpack.c.l.b16 %v257
        %v338 = vunpack.c.l.b16 %v258
        %v339 = vunpack.c.l.b16 %v259
        %v340 = vunpack.c.l.b16 %v260
        %v341 = vunpack.c.l.b16 %v261
        %v342 = vunpack.c.l.b16 %v262
        %v343 = vunpack.c.l.b16 %v263
        %v344 = vunpack.c.l.b16 %v264
        %v345 = vunpack.c.l.b16 %v265
        %v346 = vunpack.c.l.b16 %v266
        %v347 = vunpack.c.l.b16 %v267
        %v348 = vpack.c.b16 %v333, %v332
        %v349 = vpack.c.b16 %v335, %v334
        %v350 = vpack.c.b16 %v337, %v336
        %v351 = vpack.c.b16 %v339, %v338
        %v352 = vpack.c.b16 %v341, %v340
        %v353 = vpack.c.b16 %v343, %v342
        %v354 = vpack.c.b16 %v345, %v344
        %v355 = vpack.c.b16 %v347, %v346
        %364 = vmatprep.subr.bf16.mxu0 0
        %365 = vmatpush1.bf16.msra.mxu0 %v348
        %366 = vmatprep.subr.bf16.mxu0 0
        %367 = vmatpush1.bf16.msra.mxu0 %v349
        %368 = vmatprep.subr.bf16.mxu0 0
        %369 = vmatpush1.bf16.msra.mxu0 %v350
        %370 = vmatprep.subr.bf16.mxu0 0
        %371 = vmatpush1.bf16.msra.mxu0 %v351
        %372 = vmatprep.subr.bf16.mxu0 0
        %373 = vmatpush1.bf16.msra.mxu0 %v352
        %374 = vmatprep.subr.bf16.mxu0 0
        %375 = vmatpush1.bf16.msra.mxu0 %v353
        %376 = vmatprep.subr.bf16.mxu0 0
        %377 = vmatpush1.bf16.msra.mxu0 %v354
        %378 = vmatprep.subr.bf16.mxu0 0
        %379 = vmatpush1.bf16.msra.mxu0 %v355
        %380 = vmatprep.subr.bf16.mxu0 0
        %381 = vmatpush1.bf16.msra.mxu0 0
        %382 = vmatprep.subr.bf16.mxu0 0
        %383 = vmatpush1.bf16.msra.mxu0 0
        %384 = vmatprep.subr.bf16.mxu0 0
        %385 = vmatpush1.bf16.msra.mxu0 0
        %386 = vmatprep.subr.bf16.mxu0 0
        %387 = vmatpush1.bf16.msra.mxu0 0
        %388 = vmatprep.subr.bf16.mxu0 0
        %389 = vmatpush1.bf16.msra.mxu0 0
        %390 = vmatprep.subr.bf16.mxu0 0
        %391 = vmatpush1.bf16.msra.mxu0 0
        %392 = vmatprep.subr.bf16.mxu0 0
        %393 = vmatpush1.bf16.msra.mxu0 0
        %394 = vmatprep.subr.bf16.mxu0 0
        %395 = vmatpush1.bf16.msra.mxu0 0
        %396 = vmatprep.mubr.bf16.mxu0 0
        %397 = vmatmul.mubr.bf16.gmra.mrb[0].mxu0 %v300
        %v398 = vpop.f32.mrb[0].mxu0
        %v399 = vadd.f32 0.0, %v398
        %v400 = vpop.f32.mrb[0].mxu0
        %v401 = vpop.f32.mrb[0].mxu0
        %v402 = vadd.f32 0.0, %v401
        %v403 = vpop.f32.mrb[0].mxu0
        %404 = vmatprep.mubr.bf16.mxu0 0
        %405 = vmatmul.mubr.bf16.gmra.mrb[0].mxu0 %v301
        %v406 = vpop.f32.mrb[0].mxu0
        %v407 = vadd.f32 0.0, %v406
        %v408 = vpop.f32.mrb[0].mxu0
        %v409 = vpop.f32.mrb[0].mxu0
        %v410 = vadd.f32 0.0, %v409
        %v411 = vpop.f32.mrb[0].mxu0
        %412 = vmatprep.mubr.bf16.mxu0 0
        %413 = vmatmul.mubr.bf16.gmra.mrb[0].mxu0 %v302
        %v414 = vpop.f32.mrb[0].mxu0
        %v415 = vadd.f32 0.0, %v414
        %v416 = vpop.f32.mrb[0].mxu0
        %v417 = vpop.f32.mrb[0].mxu0
        %v418 = vadd.f32 0.0, %v417
        %v419 = vpop.f32.mrb[0].mxu0
        %420 = vmatprep.mubr.bf16.mxu0 0
        %421 = vmatmul.mubr.bf16.gmra.mrb[0].mxu0 %v303
        %v422 = vpop.f32.mrb[0].mxu0
        %v423 = vadd.f32 0.0, %v422
        %v424 = vpop.f32.mrb[0].mxu0
        %v425 = vpop.f32.mrb[0].mxu0
        %v426 = vadd.f32 0.0, %v425
        %v427 = vpop.f32.mrb[0].mxu0
        %428 = vmatprep.mubr.bf16.mxu0 0
        %429 = vmatmul.mubr.bf16.gmra.mrb[0].mxu0 %v304
        %v430 = vpop.f32.mrb[0].mxu0
        %v431 = vadd.f32 0.0, %v430
        %v432 = vpop.f32.mrb[0].mxu0
        %v433 = vpop.f32.mrb[0].mxu0
        %v434 = vadd.f32 0.0, %v433
        %v435 = vpop.f32.mrb[0].mxu0
        %436 = vmatprep.mubr.bf16.mxu0 0
        %437 = vmatmul.mubr.bf16.gmra.mrb[0].mxu0 %v305
        %v438 = vpop.f32.mrb[0].mxu0
        %v439 = vadd.f32 0.0, %v438
        %v440 = vpop.f32.mrb[0].mxu0
        %v441 = vpop.f32.mrb[0].mxu0
        %v442 = vadd.f32 0.0, %v441
        %v443 = vpop.f32.mrb[0].mxu0
        %444 = vmatprep.mubr.bf16.mxu0 0
        %445 = vmatmul.mubr.bf16.gmra.mrb[0].mxu0 %v306
        %v446 = vpop.f32.mrb[0].mxu0
        %v447 = vadd.f32 0.0, %v446
        %v448 = vpop.f32.mrb[0].mxu0
        %v449 = vpop.f32.mrb[0].mxu0
        %v450 = vadd.f32 0.0, %v449
        %v451 = vpop.f32.mrb[0].mxu0
        %452 = vmatprep.mubr.bf16.mxu0 0
        %453 = vmatmul.mubr.bf16.gmra.mrb[0].mxu0 %v307
        %v454 = vpop.f32.mrb[0].mxu0
        %v455 = vadd.f32 0.0, %v454
        %v456 = vpop.f32.mrb[0].mxu0
        %v457 = vpop.f32.mrb[0].mxu0
        %v458 = vadd.f32 0.0, %v457
        %v459 = vpop.f32.mrb[0].mxu0
        %460 = vdwg.mxu0
        %v461 = vpack.c.bf16 %v402, %v399
        %v462 = vpack.c.bf16 %v410, %v407
        %v463 = vpack.c.bf16 %v418, %v415
        %v464 = vpack.c.bf16 %v426, %v423
        %v465 = vpack.c.bf16 %v434, %v431
        %v466 = vpack.c.bf16 %v442, %v439
        %v467 = vpack.c.bf16 %v450, %v447
        %v468 = vpack.c.bf16 %v458, %v455
        %v477 = vunpack.c.l.b16 %v461
        %v478 = vunpack.c.h.b16 %v461
        %v479 = vunpack.c.l.b16 %v462
        %v480 = vunpack.c.h.b16 %v462
        %v481 = vunpack.c.l.b16 %v463
        %v482 = vunpack.c.h.b16 %v463
        %v483 = vunpack.c.l.b16 %v464
        %v484 = vunpack.c.h.b16 %v464
        %v485 = vunpack.c.l.b16 %v465
        %v486 = vunpack.c.h.b16 %v465
        %v487 = vunpack.c.l.b16 %v466
        %v488 = vunpack.c.h.b16 %v466
        %v489 = vunpack.c.l.b16 %v467
        %v490 = vunpack.c.h.b16 %v467
        %v491 = vunpack.c.l.b16 %v468
        %v492 = vunpack.c.h.b16 %v468
        %v493 = vpack.c.b16 %v477, %v477
        %v494 = vpack.c.b16 %v478, %v478
        %v495 = vpack.c.b16 %v479, %v479
        %v496 = vpack.c.b16 %v480, %v480
        %v497 = vpack.c.b16 %v481, %v481
        %v498 = vpack.c.b16 %v482, %v482
        %v499 = vpack.c.b16 %v483, %v483
        %v500 = vpack.c.b16 %v484, %v484
        %v501 = vpack.c.b16 %v485, %v485
        %v502 = vpack.c.b16 %v486, %v486
        %v503 = vpack.c.b16 %v487, %v487
        %v504 = vpack.c.b16 %v488, %v488
        %v505 = vpack.c.b16 %v489, %v489
        %v506 = vpack.c.b16 %v490, %v490
        %v507 = vpack.c.b16 %v491, %v491
        %v508 = vpack.c.b16 %v492, %v492
        %525 = vst [vmem:[%s225] sm:$0xf] %v493
        %526 = vst [vmem:[%s225 + $0x4] sm:$0xf] %v494
        %527 = vst [vmem:[%s225 + $0x8] sm:$0xf] %v495
        %528 = vst [vmem:[%s225 + $0xc] sm:$0xf] %v496
        %529 = vst [vmem:[%s225 + $0x10] sm:$0xf] %v497
        %530 = vst [vmem:[%s225 + $0x14] sm:$0xf] %v498
        %531 = vst [vmem:[%s225 + $0x18] sm:$0xf] %v499
        %532 = vst [vmem:[%s225 + $0x1c] sm:$0xf] %v500
        %533 = vst [vmem:[%s225 + $0x20] sm:$0xf] %v501
        %534 = vst [vmem:[%s225 + $0x24] sm:$0xf] %v502
        %535 = vst [vmem:[%s225 + $0x28] sm:$0xf] %v503
        %536 = vst [vmem:[%s225 + $0x2c] sm:$0xf] %v504
        %537 = vst [vmem:[%s225 + $0x30] sm:$0xf] %v505
        %538 = vst [vmem:[%s225 + $0x34] sm:$0xf] %v506
        %539 = vst [vmem:[%s225 + $0x38] sm:$0xf] %v507
        %540 = vst [vmem:[%s225 + $0x3c] sm:$0xf] %v508
        %p541 = scmp.eq.s32.totalorder %s30, 0
        // Predicated region
        $region37: #{tpu_custom_call.1} parent=27 // pred_check
          %p542 = pneg %p541
        $region38: #{tpu_custom_call.1} parent=27 // pred_check_branch
          %544 = sbr.rel (%p542) target = $region40
        $region39: #{tpu_custom_call.1} parent=27 // pred_region
          %545 = vst [vmem:[%s232] sm:$0x3] 0.0
        $region40: #{tpu_custom_call.1} parent=27 // pred_fallthru
          _
        %v546 = vadd.f32 %v399, %v402
        %v547 = vadd.f32 %v546, %v407
        %v548 = vadd.f32 %v547, %v410
        %v549 = vadd.f32 %v548, %v415
        %v550 = vadd.f32 %v549, %v418
        %v551 = vadd.f32 %v550, %v423
        %v552 = vadd.f32 %v551, %v426
        %v553 = vadd.f32 %v552, %v431
        %v554 = vadd.f32 %v553, %v434
        %v555 = vadd.f32 %v554, %v439
        %v556 = vadd.f32 %v555, %v442
        %v557 = vadd.f32 %v556, %v447
        %v558 = vadd.f32 %v557, %v450
        %v559 = vadd.f32 %v558, %v455
        %v560 = vadd.f32 %v559, %v458
        %v561 = vrot.slane %v560, 4
        %v562 = vadd.f32 %v560, %v561
        %v563 = vrot.slane %v562, 2
        %v564 = vadd.f32 %v562, %v563
        %v565 = vrot.slane %v564, 1
        %v566 = vadd.f32 %v564, %v565
        %v567 = vmul.f32 %v399, %v399
        %v568 = vmul.f32 %v402, %v402
        %v569 = vmul.f32 %v407, %v407
        %v570 = vmul.f32 %v410, %v410
        %v571 = vmul.f32 %v415, %v415
        %v572 = vmul.f32 %v418, %v418
        %v573 = vmul.f32 %v423, %v423
        %v574 = vmul.f32 %v426, %v426
        %v575 = vmul.f32 %v431, %v431
        %v576 = vmul.f32 %v434, %v434
        %v577 = vmul.f32 %v439, %v439
        %v578 = vmul.f32 %v442, %v442
        %v579 = vmul.f32 %v447, %v447
        %v580 = vmul.f32 %v450, %v450
        %v581 = vmul.f32 %v455, %v455
        %v582 = vmul.f32 %v458, %v458
        %v583 = vadd.f32 %v567, %v568
        %v584 = vadd.f32 %v583, %v569
        %v585 = vadd.f32 %v584, %v570
        %v586 = vadd.f32 %v585, %v571
        %v587 = vadd.f32 %v586, %v572
        %v588 = vadd.f32 %v587, %v573
        %v589 = vadd.f32 %v588, %v574
        %v590 = vadd.f32 %v589, %v575
        %v591 = vadd.f32 %v590, %v576
        %v592 = vadd.f32 %v591, %v577
        %v593 = vadd.f32 %v592, %v578
        %v594 = vadd.f32 %v593, %v579
        %v595 = vadd.f32 %v594, %v580
        %v596 = vadd.f32 %v595, %v581
        %v597 = vadd.f32 %v596, %v582
        %v598 = vrot.slane %v597, 4
        %v599 = vadd.f32 %v597, %v598
        %v600 = vrot.slane %v599, 2
        %v601 = vadd.f32 %v599, %v600
        %v602 = vrot.slane %v601, 1
        %v603 = vadd.f32 %v601, %v602
        %v604 = vld [vmem:[%s232] sm:$0x3]
        %vm605 = vcmask 1040384
        %v606 = vsel %vm605, %v566, %v603
        %v607 = vadd.f32 %v604, %v606
        %608 = vst [vmem:[%s232] sm:$0x3] %v607
        %s609 = sand.u32 %s96, 1
        %s610 = scalar_lea.sflag [#allocation4], %s609
        %s611 = sand.u32 %s96, 1
        %s612 = smul.addr %s611, 64
        %s613 = scalar_lea.vmem [#allocation7], %s612
        %s614 = sand.u32 %s122, 1
        %s615 = scalar_lea.sflag [#allocation9], %s614
        %s616 = sand.u32 %s122, 1
        %s617 = smul.addr %s616, 2
        %s618 = scalar_lea.vmem [#allocation8], %s617
        // Predicated region
        $region41: #{tpu_custom_call.1} parent=27 // pred_check
          %p619 = pneg %p106
        $region42: #{tpu_custom_call.1} parent=27 // pred_check_branch
          %621 = sbr.rel (%p619) target = $region44
        $region43: #{tpu_custom_call.1} parent=27 // pred_region
          %s622 = smul.u32 16, %s30
          %s624 = ssub.s32 1024, 1024
          %625 = vsyncadd %s610, %s624
          %s626 = smul.addr %s29, 32
          %s627 = sadd.s32 %s622, %s626
          %s628 = smul.addr %s627, 64
          %s629 = scalar_lea.hbm %s2, %s628
          %s630 = sshll.u32 %s613, 4
          %s631 = int_to_ptr.vmem [resolvable:$true] %s630
          %636 = dma.vmem_to_hbm [thread:$0]  %s631, 1024, %s629, %s610, 64, 64, 4
        $region44: #{tpu_custom_call.1} parent=27 // pred_fallthru
          _
        // Predicated region
        $region45: #{tpu_custom_call.1} parent=27 // pred_check
          %p637 = pneg %p132
        $region46: #{tpu_custom_call.1} parent=27 // pred_check_branch
          %639 = sbr.rel (%p637) target = $region48
        $region47: #{tpu_custom_call.1} parent=27 // pred_region
          %s641 = ssub.s32 32, 32
          %642 = vsyncadd %s615, %s641
          %s643 = smul.addr %s29, 32
          %s644 = scalar_lea.hbm %s3, %s643
          %s646 = sshll.u32 %s618, 4
          %s647 = int_to_ptr.vmem [resolvable:$true] %s646
          %649 = dma.vmem_to_hbm [thread:$0]  %s647, 32, %s644, %s615
        $region48: #{tpu_custom_call.1} parent=27 // pred_fallthru
          _
      $region28: #{tpu_custom_call.1} parent=5 // pred_fallthru
        _
      %p650 = scmp.le.s32.totalorder 2, %s20
      // Predicated region
      $region49: #{tpu_custom_call.1} parent=5 // pred_check
        %p651 = pneg %p650
      $region50: #{tpu_custom_call.1} parent=5 // pred_check_branch
        %653 = sbr.rel (%p651) target = $region52
      $region51: #{tpu_custom_call.1} parent=5 // pred_region
        %s654 = ssub.s32 %s20, 2
        // Predicated region
        $region53: #{tpu_custom_call.1} parent=51 // pred_check
          %p655 = pneg %p112
        $region54: #{tpu_custom_call.1} parent=51 // pred_check_branch
          %657 = sbr.rel (%p655) target = $region56
        $region55: #{tpu_custom_call.1} parent=51 // pred_region
          %s658 = sand.u32 %s97, 1
          %s659 = scalar_lea.sflag [#allocation4], %s658
          %s660 = sand.u32 %s97, 1
          %s661 = smul.addr %s660, 64
          %s662 = scalar_lea.vmem [#allocation7], %s661
          %663 = dma.done %s659, 1024
        $region56: #{tpu_custom_call.1} parent=51 // pred_fallthru
          _
        // Predicated region
        $region57: #{tpu_custom_call.1} parent=51 // pred_check
          %p664 = pneg %p138
        $region58: #{tpu_custom_call.1} parent=51 // pred_check_branch
          %666 = sbr.rel (%p664) target = $region60
        $region59: #{tpu_custom_call.1} parent=51 // pred_region
          %s667 = sand.u32 %s123, 1
          %s668 = scalar_lea.sflag [#allocation9], %s667
          %s669 = sand.u32 %s123, 1
          %s670 = smul.addr %s669, 2
          %s671 = scalar_lea.vmem [#allocation8], %s670
          %672 = dma.done %s668, 32
        $region60: #{tpu_custom_call.1} parent=51 // pred_fallthru
          _
      $region52: #{tpu_custom_call.1} parent=5 // pred_fallthru
        _
    $region6: #{tpu_custom_call.1} parent=1 // loop_footer
      %s24 = sadd.s32 1, %s20
    $region7: #{tpu_custom_call.1} parent=1 // loop_footer_branch
      %19 = sbr.rel target = $region3
    $region8: #{tpu_custom_call.1} parent=1 // loop_exit
      _
    %673 = vsyncpa [#allocation3], 1
    %s674 = scalar_lea.sflag [#allocation3], 1
    %675 = vsyncpa %s674, 1
    %676 = vsyncpa [#allocation6], 1
    %677 = vsyncpa [#allocation4], 1
    %s678 = scalar_lea.sflag [#allocation4], 1
    %679 = vsyncpa %s678, 1
    %680 = vsyncpa [#allocation9], 1
    %s681 = scalar_lea.sflag [#allocation9], 1
    %682 = vsyncpa %s681, 1

</llo_original>
